<compile_context>
chip_gen: v5e
topology: v5e:2x2
jax: 0.10.0
libtpu: 0.0.40
codegen_flags: <defaults>
</compile_context>

<pallas_src>
import jax
import jax.numpy as jnp
from jax.experimental import pallas as pl
from jax.experimental.pallas import tpu as pltpu

D_IN = 768
D_HID = 128
D_OUT = 2


def _round_up(n, m):
    return ((n + m - 1) // m) * m


def _mlp_kernel(x_ref, w1_ref, b1_ref, w2_ref, b2_ref, o_ref):
    # x_ref:  (TM, 768)  f32 VMEM tile; cast to bf16 here (hidden under DMA)
    # w1_ref: (768, 128) bf16, resident (constant index_map)
    # b1_ref: (1, 128)   f32
    # w2_ref: (128, 128) bf16, columns >= 2 are zero padding (done at load time)
    # b2_ref: (1, 128)   f32, columns >= 2 are zero padding
    # o_ref:  (TM, 2)    f32
    x_bf = x_ref[...].astype(jnp.bfloat16)
    h = jnp.dot(x_bf, w1_ref[...], preferred_element_type=jnp.float32)
    h = jnp.maximum(h + b1_ref[...], 0.0)        # bias + ReLU in f32
    # Dropout(0.5): identity in inference mode.
    out = jnp.dot(h.astype(jnp.bfloat16), w2_ref[...],
                  preferred_element_type=jnp.float32)
    out = out + b2_ref[...]
    o_ref[...] = out[:, :D_OUT].astype(o_ref.dtype)


def prepare_params(w1, b1, w2, b2):
    """One-time parameter prep (dtype casts + lane padding); not per-call."""
    w1_bf = w1.astype(jnp.bfloat16)                              # (768, 128)
    b1_f = jnp.asarray(b1, jnp.float32).reshape(1, D_HID)        # (1, 128)
    w2_p = jnp.zeros((D_HID, D_HID), jnp.bfloat16).at[:, :D_OUT].set(
        w2.astype(jnp.bfloat16))                                 # (128, 128)
    b2_p = jnp.zeros((1, D_HID), jnp.float32).at[:, :D_OUT].set(
        jnp.asarray(b2, jnp.float32).reshape(1, D_OUT))          # (1, 128)
    return w1_bf, b1_f, w2_p, b2_p


def text_classifier_forward(x, params, *, tm=1024):
    """x: (B, 768) f32.  params: output of prepare_params."""
    w1_bf, b1_f, w2_p, b2_p = params
    B = x.shape[0]

    # Row tile: large by default; shrink for small B and cap at ~B/2 (rounded
    # to a multiple of 8) so the "parallel" grid axis has >= 2 steps when B is
    # large enough (both v7x TensorCores get work).
    tm_eff = max(8, min(tm, _round_up(pl.cdiv(B, 2), 8)))
    grid = (pl.cdiv(B, tm_eff),)   # partial last block is masked by Pallas

    out = pl.pallas_call(
        _mlp_kernel,
        out_shape=jax.ShapeDtypeStruct((B, D_OUT), jnp.float32),
        grid=grid,
        in_specs=[
            pl.BlockSpec((tm_eff, D_IN), lambda i: (i, 0)),     # x tile (f32)
            # Constant index_map -> fetched once / kept resident.
            pl.BlockSpec((D_IN, D_HID), lambda i: (0, 0)),      # W1 (bf16)
            pl.BlockSpec((1, D_HID), lambda i: (0, 0)),         # b1
            pl.BlockSpec((D_HID, D_HID), lambda i: (0, 0)),     # W2 (padded bf16)
            pl.BlockSpec((1, D_HID), lambda i: (0, 0)),         # b2 (padded)
        ],
        out_specs=pl.BlockSpec((tm_eff, D_OUT), lambda i: (i, 0)),
        compiler_params=pltpu.CompilerParams(
            dimension_semantics=("parallel",),
        ),
        cost_estimate=pl.CostEstimate(
            flops=2 * B * D_IN * D_HID + 2 * B * D_HID * D_HID,
            transcendentals=0,
            bytes_accessed=(B * (D_IN * 4 + D_OUT * 4)
                            + D_IN * D_HID * 2 + D_HID * D_HID * 2
                            + 2 * D_HID * 4),
        ),
    )(x, w1_bf, b1_f, w2_p, b2_p)

    return out


def init_params(key):
    """Deterministic init mimicking nn.Linear default (U[-1/sqrt(fan_in), +])."""
    k1, k2, k3, k4 = jax.random.split(key, 4)
    bound1 = 1.0 / jnp.sqrt(jnp.float32(D_IN))
    bound2 = 1.0 / jnp.sqrt(jnp.float32(D_HID))
    # Stored already transposed: W1 is (in, hid), W2 is (hid, out).
    w1 = jax.random.uniform(k1, (D_IN, D_HID), jnp.float32, -bound1, bound1)
    b1 = jax.random.uniform(k2, (1, D_HID), jnp.float32, -bound1, bound1)
    w2 = jax.random.uniform(k3, (D_HID, D_OUT), jnp.float32, -bound2, bound2)
    b2 = jax.random.uniform(k4, (1, D_OUT), jnp.float32, -bound2, bound2)
    return w1, b1, w2, b2


def reference_forward(x, w1, b1, w2, b2):
    # Reference mirrors the kernel's bf16 matmul inputs so the tolerance only
    # has to absorb accumulation-order / rounding differences.  Note the
    # kernel therefore differs from the pure-f32 PyTorch module by bf16
    # rounding (flagged as acceptable for this classifier head).
    x32 = x.astype(jnp.bfloat16).astype(jnp.float32)
    w132 = w1.astype(jnp.bfloat16).astype(jnp.float32)
    h = jnp.maximum(x32 @ w132 + b1, 0.0)
    h32 = h.astype(jnp.bfloat16).astype(jnp.float32)
    w232 = w2.astype(jnp.bfloat16).astype(jnp.float32)
    return h32 @ w232 + b2


if __name__ == "__main__":
    key = jax.random.PRNGKey(0)
    kx, kp = jax.random.split(key)

    B = 10  # exercises the partial last block (tile 8 -> grid of 2 steps)
    x = jax.random.normal(kx, (B, D_IN), jnp.float32)
    w1, b1, w2, b2 = init_params(kp)
    params = prepare_params(w1, b1, w2, b2)  # one-time, outside per-call path

    out = text_classifier_forward(x, params)
    out = jax.block_until_ready(out)

    ref = reference_forward(x, w1, b1, w2, b2)
    assert out.shape == (B, D_OUT)
    assert jnp.allclose(out, ref, atol=5e-3, rtol=5e-3), "mismatch vs reference"

    print("KERNEL_OK")
</pallas_src>

<mosaic_0001>
module attributes {stable_mosaic.version = 11 : i64} {
  func.func @_mlp_kernel(%arg0: i32, %arg1: memref<8x768xf32, #tpu.memory_space<vmem>>, %arg2: memref<768x128xbf16, #tpu.memory_space<vmem>>, %arg3: memref<1x128xf32, #tpu.memory_space<vmem>>, %arg4: memref<128x128xbf16, #tpu.memory_space<vmem>>, %arg5: memref<1x128xf32, #tpu.memory_space<vmem>>, %arg6: memref<8x2xf32, #tpu.memory_space<vmem>>) attributes {dimension_semantics = [#tpu.dimension_semantics<parallel>], iteration_bounds = array<i64: 2>, scalar_prefetch = 0 : i64, scratch_operands = 0 : i64, tpu.core_type = #tpu.core_type<tc>, window_params = [{transform_indices = @transform_0, window_bounds = array<i64: 8, 768>}, {pipeline_mode = #tpu.pipeline_mode<synchronous>, transform_indices = @transform_1, window_bounds = array<i64: 768, 128>}, {pipeline_mode = #tpu.pipeline_mode<synchronous>, transform_indices = @transform_2, window_bounds = array<i64: 1, 128>}, {pipeline_mode = #tpu.pipeline_mode<synchronous>, transform_indices = @transform_3, window_bounds = array<i64: 128, 128>}, {pipeline_mode = #tpu.pipeline_mode<synchronous>, transform_indices = @transform_4, window_bounds = array<i64: 1, 128>}, {transform_indices = @transform_5, window_bounds = array<i64: 8, 2>}]} {
    %c0 = arith.constant 0 : index
    %c0_0 = arith.constant 0 : index
    %0 = vector.load %arg1[%c0, %c0_0] : memref<8x768xf32, #tpu.memory_space<vmem>>, vector<8x768xf32>
    %1 = arith.truncf %0 : vector<8x768xf32> to vector<8x768xbf16>
    %c0_1 = arith.constant 0 : index
    %c0_2 = arith.constant 0 : index
    %2 = vector.load %arg2[%c0_1, %c0_2] : memref<768x128xbf16, #tpu.memory_space<vmem>>, vector<768x128xbf16>
    %cst = arith.constant dense<0.000000e+00> : vector<8x128xf32>
    %3 = tpu.matmul %1, %2, %cst {dimension_numbers = #tpu.dot_dimension_numbers<[1], [0], [0], [1], [0, 0, 1, 1], [], []>} : vector<8x768xbf16>, vector<768x128xbf16>, vector<8x128xf32> -> vector<8x128xf32>
    %c0_3 = arith.constant 0 : index
    %c0_4 = arith.constant 0 : index
    %4 = vector.load %arg3[%c0_3, %c0_4] : memref<1x128xf32, #tpu.memory_space<vmem>>, vector<1x128xf32>
    %5 = vector.broadcast %4 : vector<1x128xf32> to vector<8x128xf32>
    %6 = arith.addf %3, %5 : vector<8x128xf32>
    %cst_5 = arith.constant 0.000000e+00 : f32
    %7 = vector.broadcast %cst_5 : f32 to vector<8x128xf32>
    %8 = arith.maximumf %6, %7 : vector<8x128xf32>
    %9 = arith.truncf %8 : vector<8x128xf32> to vector<8x128xbf16>
    %c0_6 = arith.constant 0 : index
    %c0_7 = arith.constant 0 : index
    %10 = vector.load %arg4[%c0_6, %c0_7] : memref<128x128xbf16, #tpu.memory_space<vmem>>, vector<128x128xbf16>
    %cst_8 = arith.constant dense<0.000000e+00> : vector<8x128xf32>
    %11 = tpu.matmul %9, %10, %cst_8 {dimension_numbers = #tpu.dot_dimension_numbers<[1], [0], [0], [1], [0, 0, 1, 1], [], []>} : vector<8x128xbf16>, vector<128x128xbf16>, vector<8x128xf32> -> vector<8x128xf32>
    %c0_9 = arith.constant 0 : index
    %c0_10 = arith.constant 0 : index
    %12 = vector.load %arg5[%c0_9, %c0_10] : memref<1x128xf32, #tpu.memory_space<vmem>>, vector<1x128xf32>
    %13 = vector.broadcast %12 : vector<1x128xf32> to vector<8x128xf32>
    %14 = arith.addf %11, %13 : vector<8x128xf32>
    %15 = vector.extract_strided_slice %14 {offsets = [0, 0], sizes = [8, 2], strides = [1, 1]} : vector<8x128xf32> to vector<8x2xf32>
    %c0_11 = arith.constant 0 : index
    %c0_12 = arith.constant 0 : index
    %16 = vector.load %arg6[%c0_11, %c0_12] : memref<8x2xf32, #tpu.memory_space<vmem>>, vector<8x2xf32>
    tpu.vector_store %arg6[%c0_11, %c0_12], %15 {strides = array<i32>} : memref<8x2xf32, #tpu.memory_space<vmem>>, vector<8x2xf32>,
    return
  }
  func.func @transform_0(%arg0: i32) -> (i32, i32) {
    %c0_i32 = arith.constant 0 : i32
    %c0_i32_0 = arith.constant 0 : i32
    return %arg0, %c0_i32 : i32, i32
  }
  func.func @transform_1(%arg0: i32) -> (i32, i32) {
    %c0_i32 = arith.constant 0 : i32
    %c0_i32_0 = arith.constant 0 : i32
    %c0_i32_1 = arith.constant 0 : i32
    return %c0_i32, %c0_i32_0 : i32, i32
  }
  func.func @transform_2(%arg0: i32) -> (i32, i32) {
    %c0_i32 = arith.constant 0 : i32
    %c0_i32_0 = arith.constant 0 : i32
    %c0_i32_1 = arith.constant 0 : i32
    return %c0_i32, %c0_i32_0 : i32, i32
  }
  func.func @transform_3(%arg0: i32) -> (i32, i32) {
    %c0_i32 = arith.constant 0 : i32
    %c0_i32_0 = arith.constant 0 : i32
    %c0_i32_1 = arith.constant 0 : i32
    return %c0_i32, %c0_i32_0 : i32, i32
  }
  func.func @transform_4(%arg0: i32) -> (i32, i32) {
    %c0_i32 = arith.constant 0 : i32
    %c0_i32_0 = arith.constant 0 : i32
    %c0_i32_1 = arith.constant 0 : i32
    return %c0_i32, %c0_i32_0 : i32, i32
  }
  func.func @transform_5(%arg0: i32) -> (i32, i32) {
    %c0_i32 = arith.constant 0 : i32
    %c0_i32_0 = arith.constant 0 : i32
    return %arg0, %c0_i32 : i32, i32
  }
}

</mosaic_0001>

<llo_original>
// kernel: tpu_custom_call.1
$region0: #{tpu_custom_call.1}
  #allocation0 [shape = 'u32[]', space=smem, size = 0x4, offset = 0x4, fixed_abs, tag = 'smem constant byte address 0x4 - core index']
  #allocation1 [shape = 'u32[72,128]{1,0:T(1,128)}', space=vmem, size = 0x9000, scoped, tag = 'internal scratch']
  %s0 = inlined_call_operand.hbm [shape: f32[10,768], index: 0, kind: input, shape index: {}]
  %s1 = inlined_call_operand.hbm [shape: bf16[768,128], index: 1, kind: input, shape index: {}]
  %s2 = inlined_call_operand.vmem [shape: f32[1,128], index: 2, kind: input, shape index: {}]
  %s3 = inlined_call_operand.hbm [shape: bf16[128,128], index: 3, kind: input, shape index: {}]
  %s4 = inlined_call_operand.vmem [shape: f32[1,128], index: 4, kind: input, shape index: {}]
  %s5 = inlined_call_operand.vmem [shape: f32[10,2], index: 5, kind: output, shape index: {}]
  %s6 = sld [smem:[#allocation0]]
  $region65: #{tpu_custom_call.1} parent=0
    _
  %s8 = ssub.s32 1, %s6
  %s9 = scalar_select 0, %s8, %s6
  $region1: #{tpu_custom_call.1} parent=0
    #allocation2 [shape = 'u8[49152]{0}', space=vmem, size = 0xc000, scoped, tag = 'input window, operand 0']
    #allocation3 [shape = 's32[2]{0}', space=sflag, size = 0x8, scoped, tag = 'scoped memory for tpu_custom_call.1']
    #allocation4 [shape = 'u8[196608]{0}', space=vmem, size = 0x30000, scoped, tag = 'input window, operand 1, single buffered']
    #allocation5 [shape = 's32[1]{0}', space=sflag, size = 0x4, scoped, tag = 'scoped memory for tpu_custom_call.1']
    #allocation6 [shape = 'u8[32768]{0}', space=vmem, size = 0x8000, scoped, tag = 'input window, operand 3, single buffered']
    %10 = vsyncpa [#allocation3], 0
    %s11 = scalar_lea.sflag [#allocation3], 1
    %12 = vsyncpa %s11, 0
    %13 = vsyncpa [#allocation5], 0
    loop: start=0, step=1, limit=4
    $region2: #{tpu_custom_call.1} parent=1 // loop_pre_header
      _
    $region3: #{tpu_custom_call.1} parent=1 // loop_header
      %s15 = sphi 0, %s19
      %p16 = scmp.ge.s32.totalorder %s15, 4
      %s25 = sphi 0, %s27
      %s28 = sphi 0, %s25
      %s29 = sphi 0, %s28
      %s45 = sphi 0, %s29
      %s49 = sphi 0, %s49
      %s51 = sphi 0, %s49
      %s52 = sphi 0, %s51
      %s66 = sphi 0, %s52
      %s70 = sphi 0, %s70
      %s72 = sphi 0, %s70
      %s73 = sphi 0, %s72
      %s87 = sphi 0, %s73
      %s91 = sphi 0, %s91
      %s93 = sphi 0, %s91
      %s94 = sphi 0, %s93
      %s108 = sphi 0, %s94
      %s112 = sphi 0, %s112
      %s114 = sphi 0, %s112
      %s115 = sphi 0, %s114
      %s129 = sphi 0, %s115
      %s135 = sphi 0, %s137
      %s138 = sphi 0, %s135
      %s139 = sphi 0, %s138
      %s155 = sphi 0, %s139
    $region4: #{tpu_custom_call.1} parent=1 // loop_header_branch
      %18 = sbr.rel (%p16) target = $region8
    $region5: #{tpu_custom_call.1} parent=1 // loop_body
      %s20 = ssub.s32 %s15, 1
      %s21 = ssub.s32 %s15, 2
      %s22 = sadd.s32 %s15, 1
      %s23 = ssub.s32 %s15, %s22
      %p24 = scmp.eq.s32.totalorder %s23, 0
      %s26 = sadd.s32 %s25, 1
      %s27 = scalar_select %p24, %s25, %s26
      %p30 = pneg %p24
      %p31 = scmp.eq.s32.totalorder %s15, 1
      %p32 = por %p30, %p31
      %p33 = scmp.ne.s32.totalorder %s25, %s28
      %p34 = scmp.eq.s32.totalorder %s15, 0
      %p35 = por %p33, %p34
      %p36 = scmp.ne.s32.totalorder %s25, %s28
      %p37 = scmp.eq.s32.totalorder %s20, 1
      %p38 = por %p36, %p37
      %p39 = scmp.ne.s32.totalorder %s28, %s29
      %p40 = scmp.eq.s32.totalorder %s20, 0
      %p41 = por %p39, %p40
      %p42 = scmp.ne.s32.totalorder %s28, %s29
      %p43 = scmp.eq.s32.totalorder %s21, 1
      %p44 = por %p42, %p43
      %p46 = scmp.ne.s32.totalorder %s29, %s45
      %p47 = scmp.eq.s32.totalorder %s21, 0
      %p48 = por %p46, %p47
      %s50 = sadd.s32 %s49, 1
      %p53 = scmp.eq.s32.totalorder %s15, 1
      %p54 = scmp.ne.s32.totalorder %s49, %s51
      %p55 = scmp.eq.s32.totalorder %s15, 0
      %p56 = por %p54, %p55
      %p57 = scmp.ne.s32.totalorder %s49, %s51
      %p58 = scmp.eq.s32.totalorder %s20, 1
      %p59 = por %p57, %p58
      %p60 = scmp.ne.s32.totalorder %s51, %s52
      %p61 = scmp.eq.s32.totalorder %s20, 0
      %p62 = por %p60, %p61
      %p63 = scmp.ne.s32.totalorder %s51, %s52
      %p64 = scmp.eq.s32.totalorder %s21, 1
      %p65 = por %p63, %p64
      %p67 = scmp.ne.s32.totalorder %s52, %s66
      %p68 = scmp.eq.s32.totalorder %s21, 0
      %p69 = por %p67, %p68
      %s71 = sadd.s32 %s70, 1
      %p74 = scmp.eq.s32.totalorder %s15, 1
      %p75 = scmp.ne.s32.totalorder %s70, %s72
      %p76 = scmp.eq.s32.totalorder %s15, 0
      %p77 = por %p75, %p76
      %p78 = scmp.ne.s32.totalorder %s70, %s72
      %p79 = scmp.eq.s32.totalorder %s20, 1
      %p80 = por %p78, %p79
      %p81 = scmp.ne.s32.totalorder %s72, %s73
      %p82 = scmp.eq.s32.totalorder %s20, 0
      %p83 = por %p81, %p82
      %p84 = scmp.ne.s32.totalorder %s72, %s73
      %p85 = scmp.eq.s32.totalorder %s21, 1
      %p86 = por %p84, %p85
      %p88 = scmp.ne.s32.totalorder %s73, %s87
      %p89 = scmp.eq.s32.totalorder %s21, 0
      %p90 = por %p88, %p89
      %s92 = sadd.s32 %s91, 1
      %p95 = scmp.eq.s32.totalorder %s15, 1
      %p96 = scmp.ne.s32.totalorder %s91, %s93
      %p97 = scmp.eq.s32.totalorder %s15, 0
      %p98 = por %p96, %p97
      %p99 = scmp.ne.s32.totalorder %s91, %s93
      %p100 = scmp.eq.s32.totalorder %s20, 1
      %p101 = por %p99, %p100
      %p102 = scmp.ne.s32.totalorder %s93, %s94
      %p103 = scmp.eq.s32.totalorder %s20, 0
      %p104 = por %p102, %p103
      %p105 = scmp.ne.s32.totalorder %s93, %s94
      %p106 = scmp.eq.s32.totalorder %s21, 1
      %p107 = por %p105, %p106
      %p109 = scmp.ne.s32.totalorder %s94, %s108
      %p110 = scmp.eq.s32.totalorder %s21, 0
      %p111 = por %p109, %p110
      %s113 = sadd.s32 %s112, 1
      %p116 = scmp.eq.s32.totalorder %s15, 1
      %p117 = scmp.ne.s32.totalorder %s112, %s114
      %p118 = scmp.eq.s32.totalorder %s15, 0
      %p119 = por %p117, %p118
      %p120 = scmp.ne.s32.totalorder %s112, %s114
      %p121 = scmp.eq.s32.totalorder %s20, 1
      %p122 = por %p120, %p121
      %p123 = scmp.ne.s32.totalorder %s114, %s115
      %p124 = scmp.eq.s32.totalorder %s20, 0
      %p125 = por %p123, %p124
      %p126 = scmp.ne.s32.totalorder %s114, %s115
      %p127 = scmp.eq.s32.totalorder %s21, 1
      %p128 = por %p126, %p127
      %p130 = scmp.ne.s32.totalorder %s115, %s129
      %p131 = scmp.eq.s32.totalorder %s21, 0
      %p132 = por %p130, %p131
      %s133 = ssub.s32 %s15, %s22
      %p134 = scmp.eq.s32.totalorder %s133, 0
      %s136 = sadd.s32 %s135, 1
      %s137 = scalar_select %p134, %s135, %s136
      %p140 = pneg %p134
      %p141 = scmp.eq.s32.totalorder %s15, 1
      %p142 = por %p140, %p141
      %p143 = scmp.ne.s32.totalorder %s135, %s138
      %p144 = scmp.eq.s32.totalorder %s15, 0
      %p145 = por %p143, %p144
      %p146 = scmp.ne.s32.totalorder %s135, %s138
      %p147 = scmp.eq.s32.totalorder %s20, 1
      %p148 = por %p146, %p147
      %p149 = scmp.ne.s32.totalorder %s138, %s139
      %p150 = scmp.eq.s32.totalorder %s20, 0
      %p151 = por %p149, %p150
      %p152 = scmp.ne.s32.totalorder %s138, %s139
      %p153 = scmp.eq.s32.totalorder %s21, 1
      %p154 = por %p152, %p153
      %p156 = scmp.ne.s32.totalorder %s139, %s155
      %p157 = scmp.eq.s32.totalorder %s21, 0
      %p158 = por %p156, %p157
      %p159 = scmp.le.s32.totalorder 1, %s15
      %p160 = scmp.lt.s32.totalorder %s15, 3
      %p161 = pnand %p159, %p160
      %p162 = pneg %p161
      // Predicated region
      $region9: #{tpu_custom_call.1} parent=5 // pred_check
        _
      $region10: #{tpu_custom_call.1} parent=5 // pred_check_branch
        %164 = sbr.rel (%p161) target = $region12
      $region11: #{tpu_custom_call.1} parent=5 // pred_region
        %s165 = ssub.s32 %s15, 1
        // Predicated region
        $region13: #{tpu_custom_call.1} parent=11 // pred_check
          %p166 = pneg %p62
        $region14: #{tpu_custom_call.1} parent=11 // pred_check_branch
          %168 = sbr.rel (%p166) target = $region16
        $region15: #{tpu_custom_call.1} parent=11 // pred_region
          %170 = vsyncadd [#allocation5], 0
          %s171 = sshll.u32 %s1, 4
          %s172 = int_to_ptr.hbm [resolvable:$true] %s171
          %s173 = sshll.u32 [#allocation4], 4
          %s174 = int_to_ptr.vmem [resolvable:$true] %s173
          %179 = dma.hbm_to_vmem [thread:$0]  %s172, 6144, %s174, [#allocation5], 64, 64, 4
        $region16: #{tpu_custom_call.1} parent=11 // pred_fallthru
          _
        // Predicated region
        $region17: #{tpu_custom_call.1} parent=11 // pred_check
          %p180 = pneg %p83
        $region18: #{tpu_custom_call.1} parent=11 // pred_check_branch
          %182 = sbr.rel (%p180) target = $region20
        $region19: #{tpu_custom_call.1} parent=11 // pred_region
          _
        $region20: #{tpu_custom_call.1} parent=11 // pred_fallthru
          _
        // Predicated region
        $region21: #{tpu_custom_call.1} parent=11 // pred_check
          %p183 = pneg %p104
        $region22: #{tpu_custom_call.1} parent=11 // pred_check_branch
          %185 = sbr.rel (%p183) target = $region24
        $region23: #{tpu_custom_call.1} parent=11 // pred_region
          %187 = vsyncadd [#allocation5], 0
          %s188 = sshll.u32 %s3, 4
          %s189 = int_to_ptr.hbm [resolvable:$true] %s188
          %s190 = sshll.u32 [#allocation6], 4
          %s191 = int_to_ptr.vmem [resolvable:$true] %s190
          %196 = dma.hbm_to_vmem [thread:$0]  %s189, 1024, %s191, [#allocation5], 64, 64, 4
        $region24: #{tpu_custom_call.1} parent=11 // pred_fallthru
          _
        // Predicated region
        $region25: #{tpu_custom_call.1} parent=11 // pred_check
          %p197 = pneg %p125
        $region26: #{tpu_custom_call.1} parent=11 // pred_check_branch
          %199 = sbr.rel (%p197) target = $region28
        $region27: #{tpu_custom_call.1} parent=11 // pred_region
          _
        $region28: #{tpu_custom_call.1} parent=11 // pred_fallthru
          _
      $region12: #{tpu_custom_call.1} parent=5 // pred_fallthru
        _
      %p200 = scmp.lt.s32.totalorder %s15, 2
      // Predicated region
      $region29: #{tpu_custom_call.1} parent=5 // pred_check
        %p201 = pneg %p200
      $region30: #{tpu_custom_call.1} parent=5 // pred_check_branch
        %203 = sbr.rel (%p201) target = $region32
      $region31: #{tpu_custom_call.1} parent=5 // pred_region
        // Predicated region
        $region33: #{tpu_custom_call.1} parent=31 // pred_check
          %p204 = pneg %p35
        $region34: #{tpu_custom_call.1} parent=31 // pred_check_branch
          %206 = sbr.rel (%p204) target = $region36
        $region35: #{tpu_custom_call.1} parent=31 // pred_region
          %s207 = sand.u32 %s25, 1
          %s208 = scalar_lea.sflag [#allocation3], %s207
          %s209 = sand.u32 %s25, 1
          %s210 = smul.addr %s209, 48
          %s211 = scalar_lea.vmem [#allocation2], %s210
          %213 = vsyncadd %s208, 0
          %s214 = smul.addr %s15, 6
          %s215 = smul.addr %s214, 8
          %s216 = scalar_lea.hbm %s0, %s215
          %s218 = sshll.u32 %s216, 4
          %s219 = int_to_ptr.hbm [resolvable:$true] %s218
          %s220 = sshll.u32 %s211, 4
          %s221 = int_to_ptr.vmem [resolvable:$true] %s220
          %223 = dma.hbm_to_vmem [thread:$0]  %s219, 768, %s221, %s208
        $region36: #{tpu_custom_call.1} parent=31 // pred_fallthru
          _
      $region32: #{tpu_custom_call.1} parent=5 // pred_fallthru
        _
      %p224 = scmp.le.s32.totalorder 1, %s15
      %p225 = scmp.lt.s32.totalorder %s15, 3
      %p226 = pnand %p224, %p225
      %p227 = pneg %p226
      // Predicated region
      $region37: #{tpu_custom_call.1} parent=5 // pred_check
        _
      $region38: #{tpu_custom_call.1} parent=5 // pred_check_branch
        %229 = sbr.rel (%p226) target = $region40
      $region39: #{tpu_custom_call.1} parent=5 // pred_region
        %s230 = ssub.s32 %s15, 1
        %s231 = sand.u32 %s28, 1
        %s232 = scalar_lea.sflag [#allocation3], %s231
        %s233 = sand.u32 %s28, 1
        %s234 = smul.addr %s233, 48
        %s235 = scalar_lea.vmem [#allocation2], %s234
        // Predicated region
        $region41: #{tpu_custom_call.1} parent=39 // pred_check
          %p236 = pneg %p41
        $region42: #{tpu_custom_call.1} parent=39 // pred_check_branch
          %238 = sbr.rel (%p236) target = $region44
        $region43: #{tpu_custom_call.1} parent=39 // pred_region
          %240 = dma.done %s232, 768
        $region44: #{tpu_custom_call.1} parent=39 // pred_fallthru
          _
        // Predicated region
        $region45: #{tpu_custom_call.1} parent=39 // pred_check
          %p241 = pneg %p62
        $region46: #{tpu_custom_call.1} parent=39 // pred_check_branch
          %243 = sbr.rel (%p241) target = $region48
        $region47: #{tpu_custom_call.1} parent=39 // pred_region
          %245 = dma.done [#allocation5], 6144
        $region48: #{tpu_custom_call.1} parent=39 // pred_fallthru
          _
        // Predicated region
        $region49: #{tpu_custom_call.1} parent=39 // pred_check
          %p246 = pneg %p104
        $region50: #{tpu_custom_call.1} parent=39 // pred_check_branch
          %248 = sbr.rel (%p246) target = $region52
        $region51: #{tpu_custom_call.1} parent=39 // pred_region
          %250 = dma.done [#allocation5], 1024
        $region52: #{tpu_custom_call.1} parent=39 // pred_fallthru
          _
        %s251 = sand.u32 %s28, 1
        %s252 = scalar_lea.sflag [#allocation3], %s251
        %s253 = sand.u32 %s28, 1
        %s254 = smul.addr %s253, 48
        %s255 = scalar_lea.vmem [#allocation2], %s254
        %p256 = pneg %p41
        %p257 = pneg %p38
        %p258 = pneg %p62
        %p259 = pneg %p59
        %p260 = pneg %p83
        %p261 = pneg %p80
        %p262 = pneg %p104
        %p263 = pneg %p101
        %p264 = pneg %p125
        %p265 = pneg %p122
        %p266 = pneg %p151
        %p267 = pneg %p148
        %p268 = scmp.lt.s32.totalorder %s20, 1
        %s269 = scalar_select %p268, %s20, 1
        %s270 = smul.addr %s269, 8
        %s271 = scalar_lea.vmem %s5, %s270
        %p272 = scmp.lt.s32.totalorder %s20, 1
        %s273 = scalar_select %p272, %s20, 1
        %s274 = smul.addr %s273, 8
        %s275 = scalar_lea.vmem %s5, %s274
        %v276 = vld [vmem:[%s235] sm:$0xff]
        %v277 = vld [vmem:[%s235 + $0x8] sm:$0xff]
        %v278 = vld [vmem:[%s235 + $0x10] sm:$0xff]
        %v279 = vld [vmem:[%s235 + $0x18] sm:$0xff]
        %v280 = vld [vmem:[%s235 + $0x20] sm:$0xff]
        %v281 = vld [vmem:[%s235 + $0x28] sm:$0xff]
        %v282 = vpack.c.bf16 %v276, %v276
        %v283 = vpack.c.bf16 %v277, %v277
        %v284 = vpack.c.bf16 %v278, %v278
        %v285 = vpack.c.bf16 %v279, %v279
        %v286 = vpack.c.bf16 %v280, %v280
        %v287 = vpack.c.bf16 %v281, %v281
        %v288 = vld [vmem:[#allocation4] sm:$0xf]
        %v289 = vld [vmem:[#allocation4 + $0x4] sm:$0xf]
        %v290 = vld [vmem:[#allocation4 + $0x8] sm:$0xf]
        %v291 = vld [vmem:[#allocation4 + $0xc] sm:$0xf]
        %v292 = vld [vmem:[#allocation4 + $0x10] sm:$0xf]
        %v293 = vld [vmem:[#allocation4 + $0x14] sm:$0xf]
        %v294 = vld [vmem:[#allocation4 + $0x18] sm:$0xf]
        %v295 = vld [vmem:[#allocation4 + $0x1c] sm:$0xf]
        %v296 = vld [vmem:[#allocation4 + $0x20] sm:$0xf]
        %v297 = vld [vmem:[#allocation4 + $0x24] sm:$0xf]
        %v298 = vld [vmem:[#allocation4 + $0x28] sm:$0xf]
        %v299 = vld [vmem:[#allocation4 + $0x2c] sm:$0xf]
        %v300 = vld [vmem:[#allocation4 + $0x30] sm:$0xf]
        %v301 = vld [vmem:[#allocation4 + $0x34] sm:$0xf]
        %v302 = vld [vmem:[#allocation4 + $0x38] sm:$0xf]
        %v303 = vld [vmem:[#allocation4 + $0x3c] sm:$0xf]
        %v304 = vld [vmem:[#allocation4 + $0x40] sm:$0xf]
        %v305 = vld [vmem:[#allocation4 + $0x44] sm:$0xf]
        %v306 = vld [vmem:[#allocation4 + $0x48] sm:$0xf]
        %v307 = vld [vmem:[#allocation4 + $0x4c] sm:$0xf]
        %v308 = vld [vmem:[#allocation4 + $0x50] sm:$0xf]
        %v309 = vld [vmem:[#allocation4 + $0x54] sm:$0xf]
        %v310 = vld [vmem:[#allocation4 + $0x58] sm:$0xf]
        %v311 = vld [vmem:[#allocation4 + $0x5c] sm:$0xf]
        %v312 = vld [vmem:[#allocation4 + $0x60] sm:$0xf]
        %v313 = vld [vmem:[#allocation4 + $0x64] sm:$0xf]
        %v314 = vld [vmem:[#allocation4 + $0x68] sm:$0xf]
        %v315 = vld [vmem:[#allocation4 + $0x6c] sm:$0xf]
        %v316 = vld [vmem:[#allocation4 + $0x70] sm:$0xf]
        %v317 = vld [vmem:[#allocation4 + $0x74] sm:$0xf]
        %v318 = vld [vmem:[#allocation4 + $0x78] sm:$0xf]
        %v319 = vld [vmem:[#allocation4 + $0x7c] sm:$0xf]
        %v320 = vld [vmem:[#allocation4 + $0x80] sm:$0xf]
        %v321 = vld [vmem:[#allocation4 + $0x84] sm:$0xf]
        %v322 = vld [vmem:[#allocation4 + $0x88] sm:$0xf]
        %v323 = vld [vmem:[#allocation4 + $0x8c] sm:$0xf]
        %v324 = vld [vmem:[#allocation4 + $0x90] sm:$0xf]
        %v325 = vld [vmem:[#allocation4 + $0x94] sm:$0xf]
        %v326 = vld [vmem:[#allocation4 + $0x98] sm:$0xf]
        %v327 = vld [vmem:[#allocation4 + $0x9c] sm:$0xf]
        %v328 = vld [vmem:[#allocation4 + $0xa0] sm:$0xf]
        %v329 = vld [vmem:[#allocation4 + $0xa4] sm:$0xf]
        %v330 = vld [vmem:[#allocation4 + $0xa8] sm:$0xf]
        %v331 = vld [vmem:[#allocation4 + $0xac] sm:$0xf]
        %v332 = vld [vmem:[#allocation4 + $0xb0] sm:$0xf]
        %v333 = vld [vmem:[#allocation4 + $0xb4] sm:$0xf]
        %v334 = vld [vmem:[#allocation4 + $0xb8] sm:$0xf]
        %v335 = vld [vmem:[#allocation4 + $0xbc] sm:$0xf]
        %v336 = vld [vmem:[#allocation4 + $0xc0] sm:$0xf]
        %v337 = vld [vmem:[#allocation4 + $0xc4] sm:$0xf]
        %v338 = vld [vmem:[#allocation4 + $0xc8] sm:$0xf]
        %v339 = vld [vmem:[#allocation4 + $0xcc] sm:$0xf]
        %v340 = vld [vmem:[#allocation4 + $0xd0] sm:$0xf]
        %v341 = vld [vmem:[#allocation4 + $0xd4] sm:$0xf]
        %v342 = vld [vmem:[#allocation4 + $0xd8] sm:$0xf]
        %v343 = vld [vmem:[#allocation4 + $0xdc] sm:$0xf]
        %v344 = vld [vmem:[#allocation4 + $0xe0] sm:$0xf]
        %v345 = vld [vmem:[#allocation4 + $0xe4] sm:$0xf]
        %v346 = vld [vmem:[#allocation4 + $0xe8] sm:$0xf]
        %v347 = vld [vmem:[#allocation4 + $0xec] sm:$0xf]
        %v348 = vld [vmem:[#allocation4 + $0xf0] sm:$0xf]
        %v349 = vld [vmem:[#allocation4 + $0xf4] sm:$0xf]
        %v350 = vld [vmem:[#allocation4 + $0xf8] sm:$0xf]
        %v351 = vld [vmem:[#allocation4 + $0xfc] sm:$0xf]
        %v352 = vld [vmem:[#allocation4 + $0x100] sm:$0xf]
        %v353 = vld [vmem:[#allocation4 + $0x104] sm:$0xf]
        %v354 = vld [vmem:[#allocation4 + $0x108] sm:$0xf]
        %v355 = vld [vmem:[#allocation4 + $0x10c] sm:$0xf]
        %v356 = vld [vmem:[#allocation4 + $0x110] sm:$0xf]
        %v357 = vld [vmem:[#allocation4 + $0x114] sm:$0xf]
        %v358 = vld [vmem:[#allocation4 + $0x118] sm:$0xf]
        %v359 = vld [vmem:[#allocation4 + $0x11c] sm:$0xf]
        %v360 = vld [vmem:[#allocation4 + $0x120] sm:$0xf]
        %v361 = vld [vmem:[#allocation4 + $0x124] sm:$0xf]
        %v362 = vld [vmem:[#allocation4 + $0x128] sm:$0xf]
        %v363 = vld [vmem:[#allocation4 + $0x12c] sm:$0xf]
        %v364 = vld [vmem:[#allocation4 + $0x130] sm:$0xf]
        %v365 = vld [vmem:[#allocation4 + $0x134] sm:$0xf]
        %v366 = vld [vmem:[#allocation4 + $0x138] sm:$0xf]
        %v367 = vld [vmem:[#allocation4 + $0x13c] sm:$0xf]
        %v368 = vld [vmem:[#allocation4 + $0x140] sm:$0xf]
        %v369 = vld [vmem:[#allocation4 + $0x144] sm:$0xf]
        %v370 = vld [vmem:[#allocation4 + $0x148] sm:$0xf]
        %v371 = vld [vmem:[#allocation4 + $0x14c] sm:$0xf]
        %v372 = vld [vmem:[#allocation4 + $0x150] sm:$0xf]
        %v373 = vld [vmem:[#allocation4 + $0x154] sm:$0xf]
        %v374 = vld [vmem:[#allocation4 + $0x158] sm:$0xf]
        %v375 = vld [vmem:[#allocation4 + $0x15c] sm:$0xf]
        %v376 = vld [vmem:[#allocation4 + $0x160] sm:$0xf]
        %v377 = vld [vmem:[#allocation4 + $0x164] sm:$0xf]
        %v378 = vld [vmem:[#allocation4 + $0x168] sm:$0xf]
        %v379 = vld [vmem:[#allocation4 + $0x16c] sm:$0xf]
        %v380 = vld [vmem:[#allocation4 + $0x170] sm:$0xf]
        %v381 = vld [vmem:[#allocation4 + $0x174] sm:$0xf]
        %v382 = vld [vmem:[#allocation4 + $0x178] sm:$0xf]
        %v383 = vld [vmem:[#allocation4 + $0x17c] sm:$0xf]
        %v384 = vld [vmem:[%s2] sm:$0x1]
        %v386 = vperm.slane %v384, 0
        %v484 = vunpack.c.l.b16 %v288
        %v485 = vunpack.c.l.b16 %v289
        %v486 = vunpack.c.l.b16 %v290
        %v487 = vunpack.c.l.b16 %v291
        %v488 = vunpack.c.l.b16 %v292
        %v489 = vunpack.c.l.b16 %v293
        %v490 = vunpack.c.l.b16 %v294
        %v491 = vunpack.c.l.b16 %v295
        %v492 = vunpack.c.l.b16 %v296
        %v493 = vunpack.c.l.b16 %v297
        %v494 = vunpack.c.l.b16 %v298
        %v495 = vunpack.c.l.b16 %v299
        %v496 = vunpack.c.l.b16 %v300
        %v497 = vunpack.c.l.b16 %v301
        %v498 = vunpack.c.l.b16 %v302
        %v499 = vunpack.c.l.b16 %v303
        %v500 = vunpack.c.l.b16 %v304
        %v501 = vunpack.c.l.b16 %v305
        %v502 = vunpack.c.l.b16 %v306
        %v503 = vunpack.c.l.b16 %v307
        %v504 = vunpack.c.l.b16 %v308
        %v505 = vunpack.c.l.b16 %v309
        %v506 = vunpack.c.l.b16 %v310
        %v507 = vunpack.c.l.b16 %v311
        %v508 = vunpack.c.l.b16 %v312
        %v509 = vunpack.c.l.b16 %v313
        %v510 = vunpack.c.l.b16 %v314
        %v511 = vunpack.c.l.b16 %v315
        %v512 = vunpack.c.l.b16 %v316
        %v513 = vunpack.c.l.b16 %v317
        %v514 = vunpack.c.l.b16 %v318
        %v515 = vunpack.c.l.b16 %v319
        %v516 = vunpack.c.l.b16 %v320
        %v517 = vunpack.c.l.b16 %v321
        %v518 = vunpack.c.l.b16 %v322
        %v519 = vunpack.c.l.b16 %v323
        %v520 = vunpack.c.l.b16 %v324
        %v521 = vunpack.c.l.b16 %v325
        %v522 = vunpack.c.l.b16 %v326
        %v523 = vunpack.c.l.b16 %v327
        %v524 = vunpack.c.l.b16 %v328
        %v525 = vunpack.c.l.b16 %v329
        %v526 = vunpack.c.l.b16 %v330
        %v527 = vunpack.c.l.b16 %v331
        %v528 = vunpack.c.l.b16 %v332
        %v529 = vunpack.c.l.b16 %v333
        %v530 = vunpack.c.l.b16 %v334
        %v531 = vunpack.c.l.b16 %v335
        %v532 = vunpack.c.l.b16 %v336
        %v533 = vunpack.c.l.b16 %v337
        %v534 = vunpack.c.l.b16 %v338
        %v535 = vunpack.c.l.b16 %v339
        %v536 = vunpack.c.l.b16 %v340
        %v537 = vunpack.c.l.b16 %v341
        %v538 = vunpack.c.l.b16 %v342
        %v539 = vunpack.c.l.b16 %v343
        %v540 = vunpack.c.l.b16 %v344
        %v541 = vunpack.c.l.b16 %v345
        %v542 = vunpack.c.l.b16 %v346
        %v543 = vunpack.c.l.b16 %v347
        %v544 = vunpack.c.l.b16 %v348
        %v545 = vunpack.c.l.b16 %v349
        %v546 = vunpack.c.l.b16 %v350
        %v547 = vunpack.c.l.b16 %v351
        %v548 = vunpack.c.l.b16 %v352
        %v549 = vunpack.c.l.b16 %v353
        %v550 = vunpack.c.l.b16 %v354
        %v551 = vunpack.c.l.b16 %v355
        %v552 = vunpack.c.l.b16 %v356
        %v553 = vunpack.c.l.b16 %v357
        %v554 = vunpack.c.l.b16 %v358
        %v555 = vunpack.c.l.b16 %v359
        %v556 = vunpack.c.l.b16 %v360
        %v557 = vunpack.c.l.b16 %v361
        %v558 = vunpack.c.l.b16 %v362
        %v559 = vunpack.c.l.b16 %v363
        %v560 = vunpack.c.l.b16 %v364
        %v561 = vunpack.c.l.b16 %v365
        %v562 = vunpack.c.l.b16 %v366
        %v563 = vunpack.c.l.b16 %v367
        %v564 = vunpack.c.l.b16 %v368
        %v565 = vunpack.c.l.b16 %v369
        %v566 = vunpack.c.l.b16 %v370
        %v567 = vunpack.c.l.b16 %v371
        %v568 = vunpack.c.l.b16 %v372
        %v569 = vunpack.c.l.b16 %v373
        %v570 = vunpack.c.l.b16 %v374
        %v571 = vunpack.c.l.b16 %v375
        %v572 = vunpack.c.l.b16 %v376
        %v573 = vunpack.c.l.b16 %v377
        %v574 = vunpack.c.l.b16 %v378
        %v575 = vunpack.c.l.b16 %v379
        %v576 = vunpack.c.l.b16 %v380
        %v577 = vunpack.c.l.b16 %v381
        %v578 = vunpack.c.l.b16 %v382
        %v579 = vunpack.c.l.b16 %v383
        %v580 = vpack.c.b16 %v485, %v484
        %v581 = vpack.c.b16 %v487, %v486
        %v582 = vpack.c.b16 %v489, %v488
        %v583 = vpack.c.b16 %v491, %v490
        %v584 = vpack.c.b16 %v493, %v492
        %v585 = vpack.c.b16 %v495, %v494
        %v586 = vpack.c.b16 %v497, %v496
        %v587 = vpack.c.b16 %v499, %v498
        %v588 = vpack.c.b16 %v501, %v500
        %v589 = vpack.c.b16 %v503, %v502
        %v590 = vpack.c.b16 %v505, %v504
        %v591 = vpack.c.b16 %v507, %v506
        %v592 = vpack.c.b16 %v509, %v508
        %v593 = vpack.c.b16 %v511, %v510
        %v594 = vpack.c.b16 %v513, %v512
        %v595 = vpack.c.b16 %v515, %v514
        %v596 = vpack.c.b16 %v517, %v516
        %v597 = vpack.c.b16 %v519, %v518
        %v598 = vpack.c.b16 %v521, %v520
        %v599 = vpack.c.b16 %v523, %v522
        %v600 = vpack.c.b16 %v525, %v524
        %v601 = vpack.c.b16 %v527, %v526
        %v602 = vpack.c.b16 %v529, %v528
        %v603 = vpack.c.b16 %v531, %v530
        %v604 = vpack.c.b16 %v533, %v532
        %v605 = vpack.c.b16 %v535, %v534
        %v606 = vpack.c.b16 %v537, %v536
        %v607 = vpack.c.b16 %v539, %v538
        %v608 = vpack.c.b16 %v541, %v540
        %v609 = vpack.c.b16 %v543, %v542
        %v610 = vpack.c.b16 %v545, %v544
        %v611 = vpack.c.b16 %v547, %v546
        %v612 = vpack.c.b16 %v549, %v548
        %v613 = vpack.c.b16 %v551, %v550
        %v614 = vpack.c.b16 %v553, %v552
        %v615 = vpack.c.b16 %v555, %v554
        %v616 = vpack.c.b16 %v557, %v556
        %v617 = vpack.c.b16 %v559, %v558
        %v618 = vpack.c.b16 %v561, %v560
        %v619 = vpack.c.b16 %v563, %v562
        %v620 = vpack.c.b16 %v565, %v564
        %v621 = vpack.c.b16 %v567, %v566
        %v622 = vpack.c.b16 %v569, %v568
        %v623 = vpack.c.b16 %v571, %v570
        %v624 = vpack.c.b16 %v573, %v572
        %v625 = vpack.c.b16 %v575, %v574
        %v626 = vpack.c.b16 %v577, %v576
        %v627 = vpack.c.b16 %v579, %v578
        %676 = vmatpush.bf16.msra.mxu0 %v587
        %677 = vmatpush.bf16.msra.mxu0 %v586
        %678 = vmatpush.bf16.msra.mxu0 %v585
        %679 = vmatpush.bf16.msra.mxu0 %v584
        %680 = vmatpush.bf16.msra.mxu0 %v583
        %681 = vmatpush.bf16.msra.mxu0 %v582
        %682 = vmatpush.bf16.msra.mxu0 %v581
        %683 = vmatpush.bf16.msra.mxu0 %v580
        %684 = vmatmul.bf16.gmra.mxu0 %v282
        %v685 = vpop.f32.mrf.mxu0
        %v686 = vadd.f32 %v386, %v685
        %v687 = vpop.f32.mrf.mxu0
        %688 = vdwg.mxu0
        %689 = vmatpush.bf16.msra.mxu0 %v595
        %690 = vmatpush.bf16.msra.mxu0 %v594
        %691 = vmatpush.bf16.msra.mxu0 %v593
        %692 = vmatpush.bf16.msra.mxu0 %v592
        %693 = vmatpush.bf16.msra.mxu0 %v591
        %694 = vmatpush.bf16.msra.mxu0 %v590
        %695 = vmatpush.bf16.msra.mxu0 %v589
        %696 = vmatpush.bf16.msra.mxu0 %v588
        %697 = vmatmul.bf16.gmra.mxu0 %v283
        %v698 = vpop.f32.mrf.mxu0
        %v699 = vadd.f32 %v686, %v698
        %v700 = vpop.f32.mrf.mxu0
        %701 = vdwg.mxu0
        %702 = vmatpush.bf16.msra.mxu0 %v603
        %703 = vmatpush.bf16.msra.mxu0 %v602
        %704 = vmatpush.bf16.msra.mxu0 %v601
        %705 = vmatpush.bf16.msra.mxu0 %v600
        %706 = vmatpush.bf16.msra.mxu0 %v599
        %707 = vmatpush.bf16.msra.mxu0 %v598
        %708 = vmatpush.bf16.msra.mxu0 %v597
        %709 = vmatpush.bf16.msra.mxu0 %v596
        %710 = vmatmul.bf16.gmra.mxu0 %v284
        %v711 = vpop.f32.mrf.mxu0
        %v712 = vadd.f32 %v699, %v711
        %v713 = vpop.f32.mrf.mxu0
        %714 = vdwg.mxu0
        %715 = vmatpush.bf16.msra.mxu0 %v611
        %716 = vmatpush.bf16.msra.mxu0 %v610
        %717 = vmatpush.bf16.msra.mxu0 %v609
        %718 = vmatpush.bf16.msra.mxu0 %v608
        %719 = vmatpush.bf16.msra.mxu0 %v607
        %720 = vmatpush.bf16.msra.mxu0 %v606
        %721 = vmatpush.bf16.msra.mxu0 %v605
        %722 = vmatpush.bf16.msra.mxu0 %v604
        %723 = vmatmul.bf16.gmra.mxu0 %v285
        %v724 = vpop.f32.mrf.mxu0
        %v725 = vadd.f32 %v712, %v724
        %v726 = vpop.f32.mrf.mxu0
        %727 = vdwg.mxu0
        %728 = vmatpush.bf16.msra.mxu0 %v619
        %729 = vmatpush.bf16.msra.mxu0 %v618
        %730 = vmatpush.bf16.msra.mxu0 %v617
        %731 = vmatpush.bf16.msra.mxu0 %v616
        %732 = vmatpush.bf16.msra.mxu0 %v615
        %733 = vmatpush.bf16.msra.mxu0 %v614
        %734 = vmatpush.bf16.msra.mxu0 %v613
        %735 = vmatpush.bf16.msra.mxu0 %v612
        %736 = vmatmul.bf16.gmra.mxu0 %v286
        %v737 = vpop.f32.mrf.mxu0
        %v738 = vadd.f32 %v725, %v737
        %v739 = vpop.f32.mrf.mxu0
        %740 = vdwg.mxu0
        %741 = vmatpush.bf16.msra.mxu0 %v627
        %742 = vmatpush.bf16.msra.mxu0 %v626
        %743 = vmatpush.bf16.msra.mxu0 %v625
        %744 = vmatpush.bf16.msra.mxu0 %v624
        %745 = vmatpush.bf16.msra.mxu0 %v623
        %746 = vmatpush.bf16.msra.mxu0 %v622
        %747 = vmatpush.bf16.msra.mxu0 %v621
        %748 = vmatpush.bf16.msra.mxu0 %v620
        %749 = vmatmul.bf16.gmra.mxu0 %v287
        %v750 = vpop.f32.mrf.mxu0
        %v751 = vadd.f32 %v738, %v750
        %v752 = vpop.f32.mrf.mxu0
        %753 = vdwg.mxu0
        %v754 = vmax.f32 %v751, 0.0
        %v755 = vpack.c.bf16 %v754, %v754
        %v756 = vld [vmem:[#allocation6] sm:$0xf]
        %v757 = vld [vmem:[#allocation6 + $0x4] sm:$0xf]
        %v758 = vld [vmem:[#allocation6 + $0x8] sm:$0xf]
        %v759 = vld [vmem:[#allocation6 + $0xc] sm:$0xf]
        %v760 = vld [vmem:[#allocation6 + $0x10] sm:$0xf]
        %v761 = vld [vmem:[#allocation6 + $0x14] sm:$0xf]
        %v762 = vld [vmem:[#allocation6 + $0x18] sm:$0xf]
        %v763 = vld [vmem:[#allocation6 + $0x1c] sm:$0xf]
        %v764 = vld [vmem:[#allocation6 + $0x20] sm:$0xf]
        %v765 = vld [vmem:[#allocation6 + $0x24] sm:$0xf]
        %v766 = vld [vmem:[#allocation6 + $0x28] sm:$0xf]
        %v767 = vld [vmem:[#allocation6 + $0x2c] sm:$0xf]
        %v768 = vld [vmem:[#allocation6 + $0x30] sm:$0xf]
        %v769 = vld [vmem:[#allocation6 + $0x34] sm:$0xf]
        %v770 = vld [vmem:[#allocation6 + $0x38] sm:$0xf]
        %v771 = vld [vmem:[#allocation6 + $0x3c] sm:$0xf]
        %v772 = vld [vmem:[%s4] sm:$0x1]
        %v774 = vperm.slane %v772, 0
        %v792 = vunpack.c.l.b16 %v756
        %v793 = vunpack.c.l.b16 %v757
        %v794 = vunpack.c.l.b16 %v758
        %v795 = vunpack.c.l.b16 %v759
        %v796 = vunpack.c.l.b16 %v760
        %v797 = vunpack.c.l.b16 %v761
        %v798 = vunpack.c.l.b16 %v762
        %v799 = vunpack.c.l.b16 %v763
        %v800 = vunpack.c.l.b16 %v764
        %v801 = vunpack.c.l.b16 %v765
        %v802 = vunpack.c.l.b16 %v766
        %v803 = vunpack.c.l.b16 %v767
        %v804 = vunpack.c.l.b16 %v768
        %v805 = vunpack.c.l.b16 %v769
        %v806 = vunpack.c.l.b16 %v770
        %v807 = vunpack.c.l.b16 %v771
        %v808 = vpack.c.b16 %v793, %v792
        %v809 = vpack.c.b16 %v795, %v794
        %v810 = vpack.c.b16 %v797, %v796
        %v811 = vpack.c.b16 %v799, %v798
        %v812 = vpack.c.b16 %v801, %v800
        %v813 = vpack.c.b16 %v803, %v802
        %v814 = vpack.c.b16 %v805, %v804
        %v815 = vpack.c.b16 %v807, %v806
        %824 = vmatpush.bf16.msra.mxu0 %v815
        %825 = vmatpush.bf16.msra.mxu0 %v814
        %826 = vmatpush.bf16.msra.mxu0 %v813
        %827 = vmatpush.bf16.msra.mxu0 %v812
        %828 = vmatpush.bf16.msra.mxu0 %v811
        %829 = vmatpush.bf16.msra.mxu0 %v810
        %830 = vmatpush.bf16.msra.mxu0 %v809
        %831 = vmatpush.bf16.msra.mxu0 %v808
        %832 = vmatmul.bf16.gmra.mxu0 %v755
        %v833 = vpop.f32.mrf.mxu0
        %v834 = vadd.f32 %v774, %v833
        %v835 = vpop.f32.mrf.mxu0
        %836 = vdwg.mxu0
        %vm837 = vcmask 15360
        %838 = vst.msk [vmem:[%s275] sm:$0xff] %vm837, %v834
        %p839 = scmp.lt.s32.totalorder %s20, 1
        %s840 = scalar_select %p839, %s20, 1
        %s841 = smul.addr %s840, 8
        %s842 = scalar_lea.vmem %s5, %s841
        // Predicated region
        $region53: #{tpu_custom_call.1} parent=39 // pred_check
          %p843 = pneg %p148
        $region54: #{tpu_custom_call.1} parent=39 // pred_check_branch
          %845 = sbr.rel (%p843) target = $region56
        $region55: #{tpu_custom_call.1} parent=39 // pred_region
          _
        $region56: #{tpu_custom_call.1} parent=39 // pred_fallthru
          _
      $region40: #{tpu_custom_call.1} parent=5 // pred_fallthru
        _
      %p846 = scmp.le.s32.totalorder 2, %s15
      // Predicated region
      $region57: #{tpu_custom_call.1} parent=5 // pred_check
        %p847 = pneg %p846
      $region58: #{tpu_custom_call.1} parent=5 // pred_check_branch
        %849 = sbr.rel (%p847) target = $region60
      $region59: #{tpu_custom_call.1} parent=5 // pred_region
        %s850 = ssub.s32 %s15, 2
        // Predicated region
        $region61: #{tpu_custom_call.1} parent=59 // pred_check
          %p851 = pneg %p154
        $region62: #{tpu_custom_call.1} parent=59 // pred_check_branch
          %853 = sbr.rel (%p851) target = $region64
        $region63: #{tpu_custom_call.1} parent=59 // pred_region
          %p854 = scmp.lt.s32.totalorder %s21, 1
          %s855 = scalar_select %p854, %s21, 1
          %s856 = smul.addr %s855, 8
          %s857 = scalar_lea.vmem %s5, %s856
        $region64: #{tpu_custom_call.1} parent=59 // pred_fallthru
          _
      $region60: #{tpu_custom_call.1} parent=5 // pred_fallthru
        _
    $region6: #{tpu_custom_call.1} parent=1 // loop_footer
      %s19 = sadd.s32 1, %s15
    $region7: #{tpu_custom_call.1} parent=1 // loop_footer_branch
      %14 = sbr.rel target = $region3
    $region8: #{tpu_custom_call.1} parent=1 // loop_exit
      _
    %858 = vsyncpa [#allocation3], 1
    %s859 = scalar_lea.sflag [#allocation3], 1
    %860 = vsyncpa %s859, 1
    %861 = vsyncpa [#allocation5], 1

</llo_original>
